<compile_context>
chip_gen: v7x
topology: tpu7x:2x2x1
jax: 0.10.0
libtpu: 0.0.40
codegen_flags: <defaults>
</compile_context>

<pallas_src>
import jax
import jax.numpy as jnp
from jax import lax
from jax.experimental import pallas as pl
from jax.experimental.pallas import tpu as pltpu

# Shapes implied by the module: D1 * D2 == 64 (dense1 input), hidden 32, classes 3.
B, T, D1, D2 = 2, 8, 8, 8
H1, H2 = 32, 3
OUT_ROWS, OUT_LANES = 8, 128          # padded, lane/sublane-dense output tile


def tfn_kernel(x1_ref, x2_ref, wp_ref, o_ref):
    # Single invocation; everything resident in VMEM.
    # Leading-dim merge only (minor dim unchanged) -> no relayout, no transpose.
    x1f = x1_ref[...].reshape(B * T, D1)          # rows indexed by (b, t)
    x2f = x2_ref[...].reshape(B * T, D2)

    wp = wp_ref[...]                              # (D2+1, H2*D1) precomputed pack
    w3 = wp[:D2, :]                               # w3[j, c*D1+i] = (W2@W1)[c, i*D2+j]
    bc = wp[D2:D2 + 1, :H2]                       # (1, H2) fused bias b1@W2^T + b2

    # ONE MXU pass fuses the bilinear "fusion" contraction with dense1+dense2:
    #   v[(b,t), c*D1+i] = sum_j x2[b,t,j] * Wc[c, i*D2+j]
    v = jnp.dot(x2f, w3, preferred_element_type=jnp.float32)      # (B*T, H2*D1)

    # Contract i (8 lanes per class) on the VPU/XLU, then t (sublanes per batch).
    cols = [jnp.sum(x1f * v[:, c * D1:(c + 1) * D1], axis=1, keepdims=True)
            for c in range(H2)]                                   # 3 x (B*T, 1)
    q = jnp.concatenate(cols, axis=1)                             # (B*T, H2)
    logits = jnp.sum(q.reshape(B, T, H2), axis=1) + bc            # (B, H2)

    # Stable softmax; reciprocal goes to the EUP slot.
    m = jnp.max(logits, axis=-1, keepdims=True)
    e = jnp.exp(logits - m)
    probs = e * pl.reciprocal(jnp.sum(e, axis=-1, keepdims=True), approx=True)

    # Pad to a full (8,128) tile -> single unmasked, aligned store.
    row = jnp.concatenate(
        [probs, jnp.zeros((B, OUT_LANES - H2), jnp.float32)], axis=1)
    o_ref[...] = jnp.concatenate(
        [row, jnp.zeros((OUT_ROWS - B, OUT_LANES), jnp.float32)], axis=0)


def make_tfn_forward(w1, b1, w2, b2):
    """Precompute fused weights ONCE (parameter-load time); return jitted forward."""
    # dense1+dense2 fuse exactly: no nonlinearity between them, dropout = identity
    # at inference.  (Would not hold in training mode.)
    wc = jnp.dot(w2, w1, precision=lax.Precision.HIGHEST)            # (H2, D1*D2)
    # w3[j, c*D1+i] = wc[c, i*D2+j]
    w3 = jnp.transpose(wc.reshape(H2, D1, D2), (2, 0, 1)).reshape(D2, H2 * D1)
    bc = jnp.dot(b1, w2.T, precision=lax.Precision.HIGHEST) + b2     # (H2,)
    wpacked = jnp.zeros((D2 + 1, H2 * D1), jnp.float32)
    wpacked = wpacked.at[:D2, :].set(w3).at[D2, :H2].set(bc)         # bias folded in

    flops = 2 * (B * T) * D2 * (H2 * D1) + 4 * (B * T) * H2 * D1 + 16 * B * H2
    bytes_accessed = 4 * (2 * B * T * D1 + wpacked.size + OUT_ROWS * OUT_LANES)

    call = pl.pallas_call(
        tfn_kernel,
        out_shape=jax.ShapeDtypeStruct((OUT_ROWS, OUT_LANES), jnp.float32),
        in_specs=[pl.BlockSpec(memory_space=pltpu.MemorySpace.VMEM)] * 3,
        out_specs=pl.BlockSpec(memory_space=pltpu.MemorySpace.VMEM),
        cost_estimate=pl.CostEstimate(
            flops=flops,
            transcendentals=B * (H2 + 1),
            bytes_accessed=bytes_accessed,
        ),
    )

    @jax.jit
    def forward(x1, x2):
        """x1: (B,T,D1), x2: (B,T,D2) float32 -> (B, H2) softmax probabilities."""
        return call(x1, x2, wpacked)[:B, :H2]

    return forward


def ref_forward(x1, x2, w1, b1, w2, b2):
    fusion = jnp.einsum("btd,bte->bde", x1, x2)          # x1.transpose(1,2) @ x2
    flat = fusion.reshape(x1.shape[0], -1)
    h = flat @ w1.T + b1                                 # dropout = identity (eval)
    logits = h @ w2.T + b2
    return jax.nn.softmax(logits, axis=1)


if __name__ == "__main__":
    key = jax.random.PRNGKey(0)
    k_x1, k_x2, k_w1, k_b1, k_w2, k_b2 = jax.random.split(key, 6)

    x1 = jax.random.normal(k_x1, (B, T, D1), dtype=jnp.float32)
    x2 = jax.random.normal(k_x2, (B, T, D2), dtype=jnp.float32)

    # Deterministic parameter init (uniform, PyTorch-Linear-like scale).
    w1 = jax.random.uniform(k_w1, (H1, D1 * D2), jnp.float32, -0.125, 0.125)
    b1 = jax.random.uniform(k_b1, (H1,), jnp.float32, -0.125, 0.125)
    w2 = jax.random.uniform(k_w2, (H2, H1), jnp.float32, -0.176, 0.176)
    b2 = jax.random.uniform(k_b2, (H2,), jnp.float32, -0.176, 0.176)

    tfn_forward = make_tfn_forward(w1, b1, w2, b2)   # weight fusion hoisted here

    out = jax.block_until_ready(tfn_forward(x1, x2))
    ref = ref_forward(x1, x2, w1, b1, w2, b2)

    assert out.shape == (B, H2)
    # Tolerance covers approx-reciprocal in the softmax + fused-weight rounding.
    assert jnp.allclose(out, ref, atol=2e-3, rtol=2e-3), (out, ref)
    print("KERNEL_OK")
</pallas_src>

<mosaic_0001>
module attributes {stable_mosaic.version = 11 : i64} {
  func.func @tfn_kernel(%arg0: memref<2x8x8xf32, #tpu.memory_space<vmem>>, %arg1: memref<2x8x8xf32, #tpu.memory_space<vmem>>, %arg2: memref<9x24xf32, #tpu.memory_space<vmem>>, %arg3: memref<8x128xf32, #tpu.memory_space<vmem>>) attributes {dimension_semantics = [], scalar_prefetch = 0 : i64, scratch_operands = 0 : i64, tpu.core_type = #tpu.core_type<tc>} {
    %c0 = arith.constant 0 : index
    %c0_0 = arith.constant 0 : index
    %c0_1 = arith.constant 0 : index
    %0 = vector.load %arg0[%c0, %c0_0, %c0_1] : memref<2x8x8xf32, #tpu.memory_space<vmem>>, vector<2x8x8xf32>
    %1 = vector.shape_cast %0 : vector<2x8x8xf32> to vector<16x8xf32>
    %c0_2 = arith.constant 0 : index
    %c0_3 = arith.constant 0 : index
    %c0_4 = arith.constant 0 : index
    %2 = vector.load %arg1[%c0_2, %c0_3, %c0_4] : memref<2x8x8xf32, #tpu.memory_space<vmem>>, vector<2x8x8xf32>
    %3 = vector.shape_cast %2 : vector<2x8x8xf32> to vector<16x8xf32>
    %c0_5 = arith.constant 0 : index
    %c0_6 = arith.constant 0 : index
    %4 = vector.load %arg2[%c0_5, %c0_6] : memref<9x24xf32, #tpu.memory_space<vmem>>, vector<9x24xf32>
    %5 = vector.extract_strided_slice %4 {offsets = [0, 0], sizes = [8, 24], strides = [1, 1]} : vector<9x24xf32> to vector<8x24xf32>
    %6 = vector.extract_strided_slice %4 {offsets = [8, 0], sizes = [1, 3], strides = [1, 1]} : vector<9x24xf32> to vector<1x3xf32>
    %cst = arith.constant dense<0.000000e+00> : vector<16x24xf32>
    %7 = tpu.matmul %3, %5, %cst {dimension_numbers = #tpu.dot_dimension_numbers<[1], [0], [0], [1], [0, 0, 1, 1], [], []>} : vector<16x8xf32>, vector<8x24xf32>, vector<16x24xf32> -> vector<16x24xf32>
    %8 = vector.extract_strided_slice %7 {offsets = [0, 0], sizes = [16, 8], strides = [1, 1]} : vector<16x24xf32> to vector<16x8xf32>
    %9 = arith.mulf %1, %8 : vector<16x8xf32>
    %cst_7 = arith.constant dense<0.000000e+00> : vector<16xf32>
    %10 = vector.multi_reduction <add>, %9, %cst_7 [1] : vector<16x8xf32> to vector<16xf32>
    %11 = vector.shape_cast %10 : vector<16xf32> to vector<16x1xf32>
    %12 = vector.extract_strided_slice %7 {offsets = [0, 8], sizes = [16, 8], strides = [1, 1]} : vector<16x24xf32> to vector<16x8xf32>
    %13 = arith.mulf %1, %12 : vector<16x8xf32>
    %cst_8 = arith.constant dense<0.000000e+00> : vector<16xf32>
    %14 = vector.multi_reduction <add>, %13, %cst_8 [1] : vector<16x8xf32> to vector<16xf32>
    %15 = vector.shape_cast %14 : vector<16xf32> to vector<16x1xf32>
    %16 = vector.extract_strided_slice %7 {offsets = [0, 16], sizes = [16, 8], strides = [1, 1]} : vector<16x24xf32> to vector<16x8xf32>
    %17 = arith.mulf %1, %16 : vector<16x8xf32>
    %cst_9 = arith.constant dense<0.000000e+00> : vector<16xf32>
    %18 = vector.multi_reduction <add>, %17, %cst_9 [1] : vector<16x8xf32> to vector<16xf32>
    %19 = vector.shape_cast %18 : vector<16xf32> to vector<16x1xf32>
    %20 = tpu.concatenate %11, %15, %19 in 1 : vector<16x1xf32>, vector<16x1xf32>, vector<16x1xf32> -> vector<16x3xf32>
    %21 = vector.shape_cast %20 : vector<16x3xf32> to vector<2x8x3xf32>
    %cst_10 = arith.constant dense<0.000000e+00> : vector<2x3xf32>
    %22 = vector.multi_reduction <add>, %21, %cst_10 [1] : vector<2x8x3xf32> to vector<2x3xf32>
    %23 = vector.broadcast %6 : vector<1x3xf32> to vector<2x3xf32>
    %24 = arith.addf %22, %23 : vector<2x3xf32>
    %cst_11 = arith.constant dense<0xFF800000> : vector<2xf32>
    %25 = vector.multi_reduction <maximumf>, %24, %cst_11 [1] : vector<2x3xf32> to vector<2xf32>
    %26 = vector.shape_cast %25 : vector<2xf32> to vector<2x1xf32>
    %27 = vector.broadcast %26 : vector<2x1xf32> to vector<2x3xf32>
    %28 = arith.subf %24, %27 : vector<2x3xf32>
    %29 = math.exp %28 : vector<2x3xf32>
    %cst_12 = arith.constant dense<0.000000e+00> : vector<2xf32>
    %30 = vector.multi_reduction <add>, %29, %cst_12 [1] : vector<2x3xf32> to vector<2xf32>
    %31 = vector.shape_cast %30 : vector<2xf32> to vector<2x1xf32>
    %32 = tpu.reciprocal %31 {approx = true} : vector<2x1xf32> -> vector<2x1xf32>
    %33 = vector.broadcast %32 : vector<2x1xf32> to vector<2x3xf32>
    %34 = arith.mulf %29, %33 : vector<2x3xf32>
    %cst_13 = arith.constant 0.000000e+00 : f32
    %35 = vector.broadcast %cst_13 : f32 to vector<2x125xf32>
    %36 = tpu.concatenate %34, %35 in 1 : vector<2x3xf32>, vector<2x125xf32> -> vector<2x128xf32>
    %cst_14 = arith.constant 0.000000e+00 : f32
    %37 = vector.broadcast %cst_14 : f32 to vector<6x128xf32>
    %38 = tpu.concatenate %36, %37 in 0 : vector<2x128xf32>, vector<6x128xf32> -> vector<8x128xf32>
    %c0_15 = arith.constant 0 : index
    %c0_16 = arith.constant 0 : index
    %39 = vector.load %arg3[%c0_15, %c0_16] : memref<8x128xf32, #tpu.memory_space<vmem>>, vector<8x128xf32>
    tpu.vector_store %arg3[%c0_15, %c0_16], %38 {strides = array<i32>} : memref<8x128xf32, #tpu.memory_space<vmem>>, vector<8x128xf32>,
    return
  }
}

</mosaic_0001>

<llo_original>
// kernel: forward.1
$region0: #{forward.1}
  #allocation0 [shape = 'u32[]', space=smem, size = 0x4, offset = 0x4, fixed_abs, tag = 'smem constant byte address 0x4 - core index']
  #allocation1 [shape = 'u32[144,128]{1,0:T(1,128)}', space=vmem, size = 0x12000, scoped, tag = 'internal scratch']
  %s0 = inlined_call_operand.hbm [shape: f32[2,8,8], index: 0, kind: input, shape index: {}]
  %s1 = inlined_call_operand.hbm [shape: f32[2,8,8], index: 1, kind: input, shape index: {}]
  %s2 = inlined_call_operand.hbm [shape: f32[9,24], index: 2, kind: input, shape index: {}]
  %s3 = inlined_call_operand.vmem [shape: f32[8,128], index: 3, kind: output, shape index: {}]
  %s4 = sld [smem:[#allocation0]]
  $region34: #{forward.1} parent=0
    _
  %s6 = ssub.s32 1, %s4
  %s7 = scalar_select 0, %s6, %s4
  $region1: #{forward.1} parent=0
    #allocation2 [shape = 'u8[8192]{0}', space=vmem, size = 0x2000, scoped, tag = 'input window, operand 0, single buffered']
    #allocation3 [shape = 's32[1]{0}', space=sflag, size = 0x4, scoped, tag = 'scoped memory for forward.1']
    #allocation4 [shape = 'u8[8192]{0}', space=vmem, size = 0x2000, scoped, tag = 'input window, operand 1, single buffered']
    #allocation5 [shape = 's32[1]{0}', space=sflag, size = 0x4, scoped, tag = 'scoped memory for forward.1']
    #allocation6 [shape = 'u8[8192]{0}', space=vmem, size = 0x2000, scoped, tag = 'input window, operand 2, single buffered']
    %8 = vsyncpa [#allocation3], 0
    %9 = vsyncpa [#allocation5], 0
    // Predicated region
    $region2: #{forward.1} parent=1 // pred_check
      _
    $region3: #{forward.1} parent=1 // pred_check_branch
      %11 = sbr.rel (0) target = $region5
    $region4: #{forward.1} parent=1 // pred_region
      %s13 = ssub.s32 256, 256
      %14 = vsyncadd [#allocation3], %s13
      %s15 = sshll.u32 [#allocation2], 4
      %s16 = int_to_ptr.vmem [resolvable:$true] %s15
      %21 = dma.hbm_to_vmem [thread:$0]  %s0, 256, %s16, [#allocation3], 128, 128, 8
    $region5: #{forward.1} parent=1 // pred_fallthru
      _
    // Predicated region
    $region6: #{forward.1} parent=1 // pred_check
      _
    $region7: #{forward.1} parent=1 // pred_check_branch
      %23 = sbr.rel (0) target = $region9
    $region8: #{forward.1} parent=1 // pred_region
      %s25 = ssub.s32 256, 256
      %26 = vsyncadd [#allocation5], %s25
      %s27 = sshll.u32 [#allocation4], 4
      %s28 = int_to_ptr.vmem [resolvable:$true] %s27
      %33 = dma.hbm_to_vmem [thread:$0]  %s1, 256, %s28, [#allocation5], 128, 128, 8
    $region9: #{forward.1} parent=1 // pred_fallthru
      _
    // Predicated region
    $region10: #{forward.1} parent=1 // pred_check
      _
    $region11: #{forward.1} parent=1 // pred_check_branch
      %35 = sbr.rel (0) target = $region13
    $region12: #{forward.1} parent=1 // pred_region
      %s37 = ssub.s32 256, 256
      %38 = vsyncadd [#allocation5], %s37
      %s39 = sshll.u32 [#allocation6], 4
      %s40 = int_to_ptr.vmem [resolvable:$true] %s39
      %45 = dma.hbm_to_vmem [thread:$0]  %s2, 256, %s40, [#allocation5], 128, 128, 8
    $region13: #{forward.1} parent=1 // pred_fallthru
      _
    // Predicated region
    $region14: #{forward.1} parent=1 // pred_check
      _
    $region15: #{forward.1} parent=1 // pred_check_branch
      %47 = sbr.rel (0) target = $region17
    $region16: #{forward.1} parent=1 // pred_region
      %48 = dma.done [#allocation3], 256
    $region17: #{forward.1} parent=1 // pred_fallthru
      _
    // Predicated region
    $region18: #{forward.1} parent=1 // pred_check
      _
    $region19: #{forward.1} parent=1 // pred_check_branch
      %50 = sbr.rel (0) target = $region21
    $region20: #{forward.1} parent=1 // pred_region
      %51 = dma.done [#allocation5], 256
    $region21: #{forward.1} parent=1 // pred_fallthru
      _
    // Predicated region
    $region22: #{forward.1} parent=1 // pred_check
      _
    $region23: #{forward.1} parent=1 // pred_check_branch
      %53 = sbr.rel (0) target = $region25
    $region24: #{forward.1} parent=1 // pred_region
      %54 = dma.done [#allocation5], 256
    $region25: #{forward.1} parent=1 // pred_fallthru
      _
    %v55 = vld [vmem:[#allocation2] sm:$0xff]
    %v56 = vld [vmem:[#allocation2 + $0x8] sm:$0xff]
    %v57 = vld [vmem:[#allocation4] sm:$0xff]
    %v58 = vld [vmem:[#allocation4 + $0x8] sm:$0xff]
    %v59 = vld [vmem:[#allocation6] sm:$0xff]
    %v60 = vld [vmem:[#allocation6 + $0x8] sm:$0x1]
    %vm61 = vcmask 64512
    %v63 = vsel %vm61, %v57, 0
    %v66 = vsel %vm61, %v58, 0
    %68 = vmatprep.subr.mxu0 0.0
    %69 = vmatpush1.msra.mxu0 %v59
    %70 = vmatprep.subr.mxu0 0.0
    %71 = vmatpush1.msra.mxu0 0.0
    %72 = vmatprep.subr.mxu0 0.0
    %73 = vmatpush1.msra.mxu0 0.0
    %74 = vmatprep.subr.mxu0 0.0
    %75 = vmatpush1.msra.mxu0 0.0
    %76 = vmatprep.subr.mxu0 0.0
    %77 = vmatpush1.msra.mxu0 0.0
    %78 = vmatprep.subr.mxu0 0.0
    %79 = vmatpush1.msra.mxu0 0.0
    %80 = vmatprep.subr.mxu0 0.0
    %81 = vmatpush1.msra.mxu0 0.0
    %82 = vmatprep.subr.mxu0 0.0
    %83 = vmatpush1.msra.mxu0 0.0
    %84 = vmatprep.subr.mxu0 0.0
    %85 = vmatpush1.msra.mxu0 0.0
    %86 = vmatprep.subr.mxu0 0.0
    %87 = vmatpush1.msra.mxu0 0.0
    %88 = vmatprep.subr.mxu0 0.0
    %89 = vmatpush1.msra.mxu0 0.0
    %90 = vmatprep.subr.mxu0 0.0
    %91 = vmatpush1.msra.mxu0 0.0
    %92 = vmatprep.subr.mxu0 0.0
    %93 = vmatpush1.msra.mxu0 0.0
    %94 = vmatprep.subr.mxu0 0.0
    %95 = vmatpush1.msra.mxu0 0.0
    %96 = vmatprep.subr.mxu0 0.0
    %97 = vmatpush1.msra.mxu0 0.0
    %98 = vmatprep.subr.mxu0 0.0
    %99 = vmatpush1.msra.mxu0 0.0
    %100 = vmatprep.subr.mxu0 0.0
    %101 = vmatpush1.msra.mxu0 0.0
    %102 = vmatprep.subr.mxu0 0.0
    %103 = vmatpush1.msra.mxu0 0.0
    %104 = vmatprep.subr.mxu0 0.0
    %105 = vmatpush1.msra.mxu0 0.0
    %106 = vmatprep.subr.mxu0 0.0
    %107 = vmatpush1.msra.mxu0 0.0
    %108 = vmatprep.subr.mxu0 0.0
    %109 = vmatpush1.msra.mxu0 0.0
    %110 = vmatprep.subr.mxu0 0.0
    %111 = vmatpush1.msra.mxu0 0.0
    %112 = vmatprep.subr.mxu0 0.0
    %113 = vmatpush1.msra.mxu0 0.0
    %114 = vmatprep.subr.mxu0 0.0
    %115 = vmatpush1.msra.mxu0 0.0
    %116 = vmatprep.subr.mxu0 0.0
    %117 = vmatpush1.msra.mxu0 0.0
    %118 = vmatprep.subr.mxu0 0.0
    %119 = vmatpush1.msra.mxu0 0.0
    %120 = vmatprep.subr.mxu0 0.0
    %121 = vmatpush1.msra.mxu0 0.0
    %122 = vmatprep.subr.mxu0 0.0
    %123 = vmatpush1.msra.mxu0 0.0
    %124 = vmatprep.subr.mxu0 0.0
    %125 = vmatpush1.msra.mxu0 0.0
    %126 = vmatprep.subr.mxu0 0.0
    %127 = vmatpush1.msra.mxu0 0.0
    %128 = vmatprep.subr.mxu0 0.0
    %129 = vmatpush1.msra.mxu0 0.0
    %130 = vmatprep.subr.mxu0 0.0
    %131 = vmatpush1.msra.mxu0 0.0
    %132 = vmatprep.mubr.f32.mxu0 0.0
    %133 = vmatmul.mubr.f32.gmra.mrb[0].mxu0 %v63
    %v134 = vpop.f32.mrb[0].mxu0
    %v135 = vadd.f32 0.0, %v134
    %v136 = vpop.f32.mrb[0].mxu0
    %137 = vmatprep.mubr.f32.mxu0 0.0
    %138 = vmatmul.mubr.f32.gmra.mrb[0].mxu0 %v66
    %v139 = vpop.f32.mrb[0].mxu0
    %v140 = vadd.f32 0.0, %v139
    %v141 = vpop.f32.mrb[0].mxu0
    %142 = vdwg.mxu0
    %v143 = vmul.f32 %v55, %v135
    %v144 = vmul.f32 %v56, %v140
    %v145 = vsel %vm61, %v143, 0.0
    %146 = vadd.xlane.f32.xlu0 %v145
    %v147 = vpop.xlane.xlu0 %146
    %v148 = vsel %vm61, %v144, 0.0
    %149 = vadd.xlane.f32.xlu0 %v148
    %v150 = vpop.xlane.xlu0 %149
    %153 = vrot.lane.b32.xlu0 %v135, 120
    %v154 = vpop.permute.xlu0 %153
    %155 = vrot.lane.b32.xlu0 %v140, 120
    %v156 = vpop.permute.xlu0 %155
    %v159 = vmul.f32 %v55, %v154
    %v160 = vmul.f32 %v56, %v156
    %v161 = vsel %vm61, %v159, 0.0
    %162 = vadd.xlane.f32.xlu0 %v161
    %v163 = vpop.xlane.xlu0 %162
    %v164 = vsel %vm61, %v160, 0.0
    %165 = vadd.xlane.f32.xlu0 %v164
    %v166 = vpop.xlane.xlu0 %165
    %167 = vrot.lane.b32.xlu0 %v135, 112
    %v168 = vpop.permute.xlu0 %167
    %169 = vrot.lane.b32.xlu0 %v140, 112
    %v170 = vpop.permute.xlu0 %169
    %v173 = vmul.f32 %v55, %v168
    %v174 = vmul.f32 %v56, %v170
    %v175 = vsel %vm61, %v173, 0.0
    %176 = vadd.xlane.f32.xlu0 %v175
    %v177 = vpop.xlane.xlu0 %176
    %v178 = vsel %vm61, %v174, 0.0
    %179 = vadd.xlane.f32.xlu0 %v178
    %v180 = vpop.xlane.xlu0 %179
    %vm181 = vcmask 7168
    %v182 = vsel %vm181, %v147, %v163
    %v183 = vsel %vm181, %v150, %v166
    %vm184 = vcmask 15360
    %v185 = vsel %vm184, %v182, %v177
    %v186 = vsel %vm184, %v183, %v180
    %vm187 = vcmask 23552
    %v188 = vsel %vm187, %v185, 0.0
    %v189 = vrot.slane %v188, 4
    %v190 = vadd.f32 %v188, %v189
    %v191 = vrot.slane %v190, 2
    %v192 = vadd.f32 %v190, %v191
    %v193 = vrot.slane %v192, 1
    %v194 = vadd.f32 %v192, %v193
    %v195 = vsel %vm187, %v186, 0.0
    %v196 = vrot.slane %v195, 4
    %v197 = vadd.f32 %v195, %v196
    %v198 = vrot.slane %v197, 2
    %v199 = vadd.f32 %v197, %v198
    %v200 = vrot.slane %v199, 1
    %v201 = vadd.f32 %v199, %v200
    %v202 = vlaneseq
    %v203 = vshrl.u32 %v202, 7
    %v204 = vsub.s32 0, %v203
    %v205 = vrot.slane %v60, %v204
    %v206 = vadd.f32 %v194, %v205
    %v207 = vadd.f32 %v201, %v205
    %v210 = vrot.slane %v207, 7
    %vm211 = vcmask 1041409
    %v212 = vsel %vm211, %v210, %v206
    %vm214 = vcmask 17408
    %v215 = vsel %vm214, %v212, -inf
    %216 = vmax.xlane.f32.xlu0 %v215
    %v217 = vpop.xlane.xlu0 %216
    %v219 = vrot.slane %v217, 1
    %v222 = vsub.f32 %v206, %v217
    %v223 = vsub.f32 %v207, %v219
    %v224 = vmul.f32 %v222, 1.442695
    %v225 = vpow.pop %v224
    %v226 = vmul.f32 %v223, 1.442695
    %v227 = vpow.pop %v226
    %v230 = vrot.slane %v227, 7
    %v231 = vsel %vm211, %v230, %v225
    %v233 = vsel %vm214, %v231, 0.0
    %234 = vadd.xlane.f32.xlu0 %v233
    %v235 = vpop.xlane.xlu0 %234
    %v236 = vrcp.pop %v235
    %v238 = vrot.slane %v236, 1
    %v241 = vmul.f32 %v225, %v236
    %v242 = vmul.f32 %v227, %v238
    %v245 = vrot.slane %v242, 7
    %v246 = vsel %vm211, %v245, %v241
    %v248 = vsel %vm187, %v246, 0.0
    %vm249 = vcmask 1041408
    %v250 = vsel %vm249, %v248, 0.0
    %251 = vst [vmem:[%s3] sm:$0xff] %v250
    // Predicated region
    $region26: #{forward.1} parent=1 // pred_check
      _
    $region27: #{forward.1} parent=1 // pred_check_branch
      %253 = sbr.rel (0) target = $region29
    $region28: #{forward.1} parent=1 // pred_region
      _
    $region29: #{forward.1} parent=1 // pred_fallthru
      _
    // Predicated region
    $region30: #{forward.1} parent=1 // pred_check
      _
    $region31: #{forward.1} parent=1 // pred_check_branch
      %255 = sbr.rel (0) target = $region33
    $region32: #{forward.1} parent=1 // pred_region
      _
    $region33: #{forward.1} parent=1 // pred_fallthru
      _
    %256 = vsyncpa [#allocation3], 1
    %257 = vsyncpa [#allocation5], 1

</llo_original>
